<compile_context>
chip_gen: v6e
topology: v6e:2x2x1
jax: 0.10.0
libtpu: 0.0.40
codegen_flags: <defaults>
</compile_context>

<pallas_src>
import jax
import jax.numpy as jnp
from jax import lax
from jax.experimental import pallas as pl
from jax.experimental.pallas import tpu as pltpu


def decoder_kernel(z_ref, w1_ref, b1_ref, w2_ref, b2_ref, out_ref):
    # Layer 1: (TB, Z) x (H, Z), contracting over Z (native nn.Linear layout;
    # Mosaic folds the RHS transpose into the MXU feed). bf16 in, f32 acc.
    h = lax.dot_general(
        z_ref[...], w1_ref[...],
        dimension_numbers=(((1,), (1,)), ((), ())),
        preferred_element_type=jnp.float32)
    # f32 epilogue. sigmoid(x) == 0.5*(tanh(x/2)+1) exactly; tanh is a single
    # EUP op so no divide lands on the VALU slots.
    h = 0.5 * jnp.tanh(0.5 * (h + b1_ref[...])) + 0.5

    # Layer 2: (TB, H) x (O, H), contracting over H; feed bf16 into the MXU,
    # accumulate f32.
    out = lax.dot_general(
        h.astype(w2_ref.dtype), w2_ref[...],
        dimension_numbers=(((1,), (1,)), ((), ())),
        preferred_element_type=jnp.float32)
    out_ref[...] = (out + b2_ref[...]).astype(out_ref.dtype)


def _round_up(x, m):
    return ((x + m - 1) // m) * m


def _vmem_bytes(tb, z_dim, hidden, out_ch, act_bytes, out_bytes):
    # Double-buffered activation tiles (z in, out) + weights/biases (counted
    # double-buffered, conservatively) + f32 `h` intermediate headroom.
    acts = 2 * tb * z_dim * act_bytes + 2 * tb * out_ch * out_bytes
    wts = 2 * (hidden * z_dim + out_ch * hidden) * act_bytes + 2 * (hidden + out_ch) * 4
    tmp = tb * hidden * 4
    return acts + wts + tmp


def _choose_batch_tile(B, block_b, z_dim, hidden, out_ch, act_bytes, out_bytes,
                       vmem_budget):
    """Batch tile selection:
       (a) >= 2 grid blocks whenever B >= 16 so both v7x TensorCores get work
           (costs nothing on single-TC v5e/v6e),
       (b) rows rounded to 256 when possible (v6e/v7x 2x256^2 MXU), else to 16
           (bf16 sublane packing),
       (c) shrunk until the per-step working set fits the VMEM budget
           (v7x physical VMEM is only 64 MiB)."""
    sub = 16
    if B < 16:
        return B
    cap = _round_up(pl.cdiv(B, 2), sub)          # guarantees >= 2 grid steps
    tb = min(block_b, cap)
    if tb >= 256:
        tb = (tb // 256) * 256
    else:
        tb = max((tb // sub) * sub, sub)
    while tb > sub and _vmem_bytes(tb, z_dim, hidden, out_ch,
                                   act_bytes, out_bytes) > vmem_budget:
        tb = max(((tb // 2) // sub) * sub, sub)
    return tb


def decoder_forward(z, w1, b1, w2, b2, *, block_b=2048,
                    compute_dtype=jnp.bfloat16):
    """z: (B, z_dim); w1: (hidden, z_dim); b1: (hidden,);
       w2: (out_ch, hidden); b2: (out_ch,).
       Returns (out (B, out_ch) in z.dtype, j_d scalar f32)."""
    B, Z = z.shape
    H = w1.shape[0]
    O = w2.shape[0]
    out_dtype = z.dtype

    # j_d depends only on the weights — compute it once in the wrapper in full
    # f32 (matches the PyTorch reference exactly; no per-tile VPU/XLU work).
    j_d = (jnp.sum(jnp.square(w1.astype(jnp.float32)))
           + jnp.sum(jnp.square(w2.astype(jnp.float32))))

    # bf16 MXU inputs; epilogue / accumulation stay f32 inside the kernel.
    zc = z.astype(compute_dtype)
    w1c = w1.astype(compute_dtype)
    w2c = w2.astype(compute_dtype)
    b1_2d = b1.reshape(1, H).astype(jnp.float32)
    b2_2d = b2.reshape(1, O).astype(jnp.float32)

    act_bytes = jnp.dtype(compute_dtype).itemsize
    out_bytes = jnp.dtype(out_dtype).itemsize
    vmem_budget = 48 * 1024 * 1024          # headroom under v7x 64 MiB physical
    tb = _choose_batch_tile(B, block_b, Z, H, O, act_bytes, out_bytes,
                            vmem_budget)
    grid = (pl.cdiv(B, tb),)

    # Explicit scoped-VMEM limit: defaults are 16 MiB (v5e) / 32 MiB (v6e/v7x);
    # large batch tiles need it raised. 2x headroom over the estimate, capped
    # at 64 MiB so it never exceeds v7x physical VMEM.
    est = _vmem_bytes(tb, Z, H, O, act_bytes, out_bytes)
    vmem_limit = int(min(64 * 1024 * 1024, max(2 * est, 16 * 1024 * 1024)))

    cost = pl.CostEstimate(
        flops=2 * B * (Z * H + H * O),
        transcendentals=B * H,
        bytes_accessed=(B * Z * act_bytes + (H * Z + O * H) * act_bytes
                        + (H + O) * 4 + B * O * out_bytes))

    # NOTE: the weight/bias specs (constant index_map) would ideally be
    # single-buffered via pipeline_mode=pl.Buffered(1); left at the default for
    # lowering portability — the 2x weight buffer is already counted in `est`.
    out = pl.pallas_call(
        decoder_kernel,
        out_shape=jax.ShapeDtypeStruct((B, O), out_dtype),
        grid=grid,
        in_specs=[
            pl.BlockSpec((tb, Z), lambda i: (i, 0)),   # z: batch-tiled
            pl.BlockSpec((H, Z), lambda i: (0, 0)),    # W1: VMEM-resident
            pl.BlockSpec((1, H), lambda i: (0, 0)),    # b1
            pl.BlockSpec((O, H), lambda i: (0, 0)),    # W2: VMEM-resident
            pl.BlockSpec((1, O), lambda i: (0, 0)),    # b2
        ],
        out_specs=pl.BlockSpec((tb, O), lambda i: (i, 0)),
        compiler_params=pltpu.CompilerParams(
            dimension_semantics=("parallel",),         # megacore-shardable
            vmem_limit_bytes=vmem_limit),
        cost_estimate=cost,
    )(zc, w1c, b1_2d, w2c, b2_2d)

    return out, j_d


def init_params(key, z_dim, hidden_dim, out_channel, dtype=jnp.float32):
    # Deterministic synthetic init (PyTorch-like uniform fan-in bound).
    k1, k2, k3, k4 = jax.random.split(key, 4)
    bnd1 = 1.0 / (z_dim ** 0.5)
    bnd2 = 1.0 / (hidden_dim ** 0.5)
    w1 = jax.random.uniform(k1, (hidden_dim, z_dim), dtype, -bnd1, bnd1)
    b1 = jax.random.uniform(k2, (hidden_dim,), dtype, -bnd1, bnd1)
    w2 = jax.random.uniform(k3, (out_channel, hidden_dim), dtype, -bnd2, bnd2)
    b2 = jax.random.uniform(k4, (out_channel,), dtype, -bnd2, bnd2)
    return w1, b1, w2, b2


if __name__ == "__main__":
    # Small (lane/sublane-aligned) shapes consistent with the module's forward
    # (z is (batch, z_dim)). batch=512 with the tile chooser gives a 2-step
    # "parallel" grid (256-row tiles): both v7x TensorCores get work.
    batch, z_dim, hidden_dim, out_channel = 512, 64, 128, 256

    key = jax.random.PRNGKey(0)
    kz, kp = jax.random.split(key)
    z = jax.random.normal(kz, (batch, z_dim), jnp.float32)
    w1, b1, w2, b2 = init_params(kp, z_dim, hidden_dim, out_channel)

    fwd = jax.jit(decoder_forward)
    out, j_d = fwd(z, w1, b1, w2, b2)
    jax.block_until_ready((out, j_d))

    # Pure-JAX reference: inputs rounded through bf16 the same way the kernel
    # feeds the MXU; accumulation / epilogue in f32.
    def ref(z_, w1_, b1_, w2_, b2_):
        f32 = jnp.float32
        zb = z_.astype(jnp.bfloat16).astype(f32)
        w1b = w1_.astype(jnp.bfloat16).astype(f32)
        w2b = w2_.astype(jnp.bfloat16).astype(f32)
        h = jax.nn.sigmoid(zb @ w1b.T + b1_)
        o = h.astype(jnp.bfloat16).astype(f32) @ w2b.T + b2_
        jd = jnp.sum(w1_.astype(f32) ** 2) + jnp.sum(w2_.astype(f32) ** 2)
        return o, jd

    out_ref, jd_ref = ref(z, w1, b1, w2, b2)
    assert out.shape == (batch, out_channel)
    assert out.dtype == z.dtype
    assert jnp.allclose(out, out_ref, atol=2e-2, rtol=2e-2)
    assert jnp.allclose(j_d, jd_ref, atol=1e-5, rtol=1e-5)

    # Ragged batch (B % tile != 0): exercises Pallas boundary masking of the
    # partial last block — no garbage rows allowed.
    z_r = jax.random.normal(jax.random.PRNGKey(1), (100, z_dim), jnp.float32)
    out_r, _ = fwd(z_r, w1, b1, w2, b2)
    jax.block_until_ready(out_r)
    out_r_ref, _ = ref(z_r, w1, b1, w2, b2)
    assert out_r.shape == (100, out_channel)
    assert jnp.allclose(out_r, out_r_ref, atol=2e-2, rtol=2e-2)

    print("KERNEL_OK")
</pallas_src>

<mosaic_0001>
module attributes {stable_mosaic.version = 11 : i64} {
  func.func @decoder_kernel(%arg0: i32, %arg1: memref<256x64xbf16, #tpu.memory_space<vmem>>, %arg2: memref<128x64xbf16, #tpu.memory_space<vmem>>, %arg3: memref<1x128xf32, #tpu.memory_space<vmem>>, %arg4: memref<256x128xbf16, #tpu.memory_space<vmem>>, %arg5: memref<1x256xf32, #tpu.memory_space<vmem>>, %arg6: memref<256x256xf32, #tpu.memory_space<vmem>>) attributes {dimension_semantics = [#tpu.dimension_semantics<parallel>], iteration_bounds = array<i64: 2>, scalar_prefetch = 0 : i64, scratch_operands = 0 : i64, tpu.core_type = #tpu.core_type<tc>, window_params = [{transform_indices = @transform_0, window_bounds = array<i64: 256, 64>}, {pipeline_mode = #tpu.pipeline_mode<synchronous>, transform_indices = @transform_1, window_bounds = array<i64: 128, 64>}, {pipeline_mode = #tpu.pipeline_mode<synchronous>, transform_indices = @transform_2, window_bounds = array<i64: 1, 128>}, {pipeline_mode = #tpu.pipeline_mode<synchronous>, transform_indices = @transform_3, window_bounds = array<i64: 256, 128>}, {pipeline_mode = #tpu.pipeline_mode<synchronous>, transform_indices = @transform_4, window_bounds = array<i64: 1, 256>}, {transform_indices = @transform_5, window_bounds = array<i64: 256, 256>}]} {
    %c0 = arith.constant 0 : index
    %c0_0 = arith.constant 0 : index
    %0 = vector.load %arg1[%c0, %c0_0] : memref<256x64xbf16, #tpu.memory_space<vmem>>, vector<256x64xbf16>
    %c0_1 = arith.constant 0 : index
    %c0_2 = arith.constant 0 : index
    %1 = vector.load %arg2[%c0_1, %c0_2] : memref<128x64xbf16, #tpu.memory_space<vmem>>, vector<128x64xbf16>
    %cst = arith.constant dense<0.000000e+00> : vector<256x128xf32>
    %2 = tpu.matmul %0, %1, %cst {dimension_numbers = #tpu.dot_dimension_numbers<[1], [1], [0], [0], [0, 0, 1, 0], [], []>} : vector<256x64xbf16>, vector<128x64xbf16>, vector<256x128xf32> -> vector<256x128xf32>
    %c0_3 = arith.constant 0 : index
    %c0_4 = arith.constant 0 : index
    %3 = vector.load %arg3[%c0_3, %c0_4] : memref<1x128xf32, #tpu.memory_space<vmem>>, vector<1x128xf32>
    %4 = vector.broadcast %3 : vector<1x128xf32> to vector<256x128xf32>
    %5 = arith.addf %2, %4 : vector<256x128xf32>
    %cst_5 = arith.constant 5.000000e-01 : f32
    %6 = vector.broadcast %cst_5 : f32 to vector<256x128xf32>
    %7 = arith.mulf %6, %5 : vector<256x128xf32>
    %8 = math.tanh %7 : vector<256x128xf32>
    %cst_6 = arith.constant 5.000000e-01 : f32
    %9 = vector.broadcast %cst_6 : f32 to vector<256x128xf32>
    %10 = arith.mulf %9, %8 : vector<256x128xf32>
    %cst_7 = arith.constant 5.000000e-01 : f32
    %11 = vector.broadcast %cst_7 : f32 to vector<256x128xf32>
    %12 = arith.addf %10, %11 : vector<256x128xf32>
    %13 = arith.truncf %12 : vector<256x128xf32> to vector<256x128xbf16>
    %c0_8 = arith.constant 0 : index
    %c0_9 = arith.constant 0 : index
    %14 = vector.load %arg4[%c0_8, %c0_9] : memref<256x128xbf16, #tpu.memory_space<vmem>>, vector<256x128xbf16>
    %cst_10 = arith.constant dense<0.000000e+00> : vector<256x256xf32>
    %15 = tpu.matmul %13, %14, %cst_10 {dimension_numbers = #tpu.dot_dimension_numbers<[1], [1], [0], [0], [0, 0, 1, 0], [], []>} : vector<256x128xbf16>, vector<256x128xbf16>, vector<256x256xf32> -> vector<256x256xf32>
    %c0_11 = arith.constant 0 : index
    %c0_12 = arith.constant 0 : index
    %16 = vector.load %arg5[%c0_11, %c0_12] : memref<1x256xf32, #tpu.memory_space<vmem>>, vector<1x256xf32>
    %17 = vector.broadcast %16 : vector<1x256xf32> to vector<256x256xf32>
    %18 = arith.addf %15, %17 : vector<256x256xf32>
    %c0_13 = arith.constant 0 : index
    %c0_14 = arith.constant 0 : index
    %19 = vector.load %arg6[%c0_13, %c0_14] : memref<256x256xf32, #tpu.memory_space<vmem>>, vector<256x256xf32>
    tpu.vector_store %arg6[%c0_13, %c0_14], %18 {strides = array<i32>} : memref<256x256xf32, #tpu.memory_space<vmem>>, vector<256x256xf32>,
    return
  }
  func.func @transform_0(%arg0: i32) -> (i32, i32) {
    %c0_i32 = arith.constant 0 : i32
    %c0_i32_0 = arith.constant 0 : i32
    return %arg0, %c0_i32 : i32, i32
  }
  func.func @transform_1(%arg0: i32) -> (i32, i32) {
    %c0_i32 = arith.constant 0 : i32
    %c0_i32_0 = arith.constant 0 : i32
    %c0_i32_1 = arith.constant 0 : i32
    return %c0_i32, %c0_i32_0 : i32, i32
  }
  func.func @transform_2(%arg0: i32) -> (i32, i32) {
    %c0_i32 = arith.constant 0 : i32
    %c0_i32_0 = arith.constant 0 : i32
    %c0_i32_1 = arith.constant 0 : i32
    return %c0_i32, %c0_i32_0 : i32, i32
  }
  func.func @transform_3(%arg0: i32) -> (i32, i32) {
    %c0_i32 = arith.constant 0 : i32
    %c0_i32_0 = arith.constant 0 : i32
    %c0_i32_1 = arith.constant 0 : i32
    return %c0_i32, %c0_i32_0 : i32, i32
  }
  func.func @transform_4(%arg0: i32) -> (i32, i32) {
    %c0_i32 = arith.constant 0 : i32
    %c0_i32_0 = arith.constant 0 : i32
    %c0_i32_1 = arith.constant 0 : i32
    return %c0_i32, %c0_i32_0 : i32, i32
  }
  func.func @transform_5(%arg0: i32) -> (i32, i32) {
    %c0_i32 = arith.constant 0 : i32
    %c0_i32_0 = arith.constant 0 : i32
    return %arg0, %c0_i32 : i32, i32
  }
}

</mosaic_0001>

<llo_original>
// kernel: decoder_forward.1
$region0: #{decoder_forward.1}
  #allocation0 [shape = 'u32[]', space=smem, size = 0x4, offset = 0x4, fixed_abs, tag = 'smem constant byte address 0x4 - core index']
  #allocation1 [shape = 'u32[144,128]{1,0:T(1,128)}', space=vmem, size = 0x12000, scoped, tag = 'internal scratch']
  %s0 = inlined_call_operand.vmem [shape: bf16[512,64], index: 0, kind: input, shape index: {}]
  %s1 = inlined_call_operand.vmem [shape: bf16[128,64], index: 1, kind: input, shape index: {}]
  %s2 = inlined_call_operand.vmem [shape: f32[1,128], index: 2, kind: input, shape index: {}]
  %s3 = inlined_call_operand.vmem [shape: bf16[256,128], index: 3, kind: input, shape index: {}]
  %s4 = inlined_call_operand.vmem [shape: f32[1,256], index: 4, kind: input, shape index: {}]
  %s5 = inlined_call_operand.hbm [shape: f32[512,256], index: 5, kind: output, shape index: {}]
  %s6 = sld [smem:[#allocation0]]
  $region53: #{decoder_forward.1} parent=0
    _
  %s8 = ssub.s32 1, %s6
  %s9 = scalar_select 0, %s8, %s6
  $region1: #{decoder_forward.1} parent=0
    #allocation2 [shape = 'u8[524288]{0}', space=vmem, size = 0x80000, scoped, tag = 'output window, operand 0']
    #allocation3 [shape = 's32[2]{0}', space=sflag, size = 0x8, scoped, tag = 'scoped memory for decoder_forward.1']
    %10 = vsyncpa [#allocation3], 0
    %s11 = scalar_lea.sflag [#allocation3], 1
    %12 = vsyncpa %s11, 0
    loop: start=0, step=1, limit=4
    $region2: #{decoder_forward.1} parent=1 // loop_pre_header
      _
    $region3: #{decoder_forward.1} parent=1 // loop_header
      %s14 = sphi 0, %s18
      %p15 = scmp.ge.s32.totalorder %s14, 4
      %s24 = sphi 0, %s26
      %s27 = sphi 0, %s24
      %s28 = sphi 0, %s27
      %s44 = sphi 0, %s28
      %s48 = sphi 0, %s48
      %s50 = sphi 0, %s48
      %s51 = sphi 0, %s50
      %s65 = sphi 0, %s51
      %s69 = sphi 0, %s69
      %s71 = sphi 0, %s69
      %s72 = sphi 0, %s71
      %s86 = sphi 0, %s72
      %s90 = sphi 0, %s90
      %s92 = sphi 0, %s90
      %s93 = sphi 0, %s92
      %s107 = sphi 0, %s93
      %s111 = sphi 0, %s111
      %s113 = sphi 0, %s111
      %s114 = sphi 0, %s113
      %s128 = sphi 0, %s114
      %s134 = sphi 0, %s136
      %s137 = sphi 0, %s134
      %s138 = sphi 0, %s137
      %s154 = sphi 0, %s138
    $region4: #{decoder_forward.1} parent=1 // loop_header_branch
      %17 = sbr.rel (%p15) target = $region8
    $region5: #{decoder_forward.1} parent=1 // loop_body
      %s19 = ssub.s32 %s14, 1
      %s20 = ssub.s32 %s14, 2
      %s21 = sadd.s32 %s14, 1
      %s22 = ssub.s32 %s14, %s21
      %p23 = scmp.eq.s32.totalorder %s22, 0
      %s25 = sadd.s32 %s24, 1
      %s26 = scalar_select %p23, %s24, %s25
      %p29 = pneg %p23
      %p30 = scmp.eq.s32.totalorder %s14, 1
      %p31 = por %p29, %p30
      %p32 = scmp.ne.s32.totalorder %s24, %s27
      %p33 = scmp.eq.s32.totalorder %s14, 0
      %p34 = por %p32, %p33
      %p35 = scmp.ne.s32.totalorder %s24, %s27
      %p36 = scmp.eq.s32.totalorder %s19, 1
      %p37 = por %p35, %p36
      %p38 = scmp.ne.s32.totalorder %s27, %s28
      %p39 = scmp.eq.s32.totalorder %s19, 0
      %p40 = por %p38, %p39
      %p41 = scmp.ne.s32.totalorder %s27, %s28
      %p42 = scmp.eq.s32.totalorder %s20, 1
      %p43 = por %p41, %p42
      %p45 = scmp.ne.s32.totalorder %s28, %s44
      %p46 = scmp.eq.s32.totalorder %s20, 0
      %p47 = por %p45, %p46
      %s49 = sadd.s32 %s48, 1
      %p52 = scmp.eq.s32.totalorder %s14, 1
      %p53 = scmp.ne.s32.totalorder %s48, %s50
      %p54 = scmp.eq.s32.totalorder %s14, 0
      %p55 = por %p53, %p54
      %p56 = scmp.ne.s32.totalorder %s48, %s50
      %p57 = scmp.eq.s32.totalorder %s19, 1
      %p58 = por %p56, %p57
      %p59 = scmp.ne.s32.totalorder %s50, %s51
      %p60 = scmp.eq.s32.totalorder %s19, 0
      %p61 = por %p59, %p60
      %p62 = scmp.ne.s32.totalorder %s50, %s51
      %p63 = scmp.eq.s32.totalorder %s20, 1
      %p64 = por %p62, %p63
      %p66 = scmp.ne.s32.totalorder %s51, %s65
      %p67 = scmp.eq.s32.totalorder %s20, 0
      %p68 = por %p66, %p67
      %s70 = sadd.s32 %s69, 1
      %p73 = scmp.eq.s32.totalorder %s14, 1
      %p74 = scmp.ne.s32.totalorder %s69, %s71
      %p75 = scmp.eq.s32.totalorder %s14, 0
      %p76 = por %p74, %p75
      %p77 = scmp.ne.s32.totalorder %s69, %s71
      %p78 = scmp.eq.s32.totalorder %s19, 1
      %p79 = por %p77, %p78
      %p80 = scmp.ne.s32.totalorder %s71, %s72
      %p81 = scmp.eq.s32.totalorder %s19, 0
      %p82 = por %p80, %p81
      %p83 = scmp.ne.s32.totalorder %s71, %s72
      %p84 = scmp.eq.s32.totalorder %s20, 1
      %p85 = por %p83, %p84
      %p87 = scmp.ne.s32.totalorder %s72, %s86
      %p88 = scmp.eq.s32.totalorder %s20, 0
      %p89 = por %p87, %p88
      %s91 = sadd.s32 %s90, 1
      %p94 = scmp.eq.s32.totalorder %s14, 1
      %p95 = scmp.ne.s32.totalorder %s90, %s92
      %p96 = scmp.eq.s32.totalorder %s14, 0
      %p97 = por %p95, %p96
      %p98 = scmp.ne.s32.totalorder %s90, %s92
      %p99 = scmp.eq.s32.totalorder %s19, 1
      %p100 = por %p98, %p99
      %p101 = scmp.ne.s32.totalorder %s92, %s93
      %p102 = scmp.eq.s32.totalorder %s19, 0
      %p103 = por %p101, %p102
      %p104 = scmp.ne.s32.totalorder %s92, %s93
      %p105 = scmp.eq.s32.totalorder %s20, 1
      %p106 = por %p104, %p105
      %p108 = scmp.ne.s32.totalorder %s93, %s107
      %p109 = scmp.eq.s32.totalorder %s20, 0
      %p110 = por %p108, %p109
      %s112 = sadd.s32 %s111, 1
      %p115 = scmp.eq.s32.totalorder %s14, 1
      %p116 = scmp.ne.s32.totalorder %s111, %s113
      %p117 = scmp.eq.s32.totalorder %s14, 0
      %p118 = por %p116, %p117
      %p119 = scmp.ne.s32.totalorder %s111, %s113
      %p120 = scmp.eq.s32.totalorder %s19, 1
      %p121 = por %p119, %p120
      %p122 = scmp.ne.s32.totalorder %s113, %s114
      %p123 = scmp.eq.s32.totalorder %s19, 0
      %p124 = por %p122, %p123
      %p125 = scmp.ne.s32.totalorder %s113, %s114
      %p126 = scmp.eq.s32.totalorder %s20, 1
      %p127 = por %p125, %p126
      %p129 = scmp.ne.s32.totalorder %s114, %s128
      %p130 = scmp.eq.s32.totalorder %s20, 0
      %p131 = por %p129, %p130
      %s132 = ssub.s32 %s14, %s21
      %p133 = scmp.eq.s32.totalorder %s132, 0
      %s135 = sadd.s32 %s134, 1
      %s136 = scalar_select %p133, %s134, %s135
      %p139 = pneg %p133
      %p140 = scmp.eq.s32.totalorder %s14, 1
      %p141 = por %p139, %p140
      %p142 = scmp.ne.s32.totalorder %s134, %s137
      %p143 = scmp.eq.s32.totalorder %s14, 0
      %p144 = por %p142, %p143
      %p145 = scmp.ne.s32.totalorder %s134, %s137
      %p146 = scmp.eq.s32.totalorder %s19, 1
      %p147 = por %p145, %p146
      %p148 = scmp.ne.s32.totalorder %s137, %s138
      %p149 = scmp.eq.s32.totalorder %s19, 0
      %p150 = por %p148, %p149
      %p151 = scmp.ne.s32.totalorder %s137, %s138
      %p152 = scmp.eq.s32.totalorder %s20, 1
      %p153 = por %p151, %p152
      %p155 = scmp.ne.s32.totalorder %s138, %s154
      %p156 = scmp.eq.s32.totalorder %s20, 0
      %p157 = por %p155, %p156
      %p158 = scmp.le.s32.totalorder 1, %s14
      %p159 = scmp.lt.s32.totalorder %s14, 3
      %p160 = pnand %p158, %p159
      %p161 = pneg %p160
      // Predicated region
      $region9: #{decoder_forward.1} parent=5 // pred_check
        _
      $region10: #{decoder_forward.1} parent=5 // pred_check_branch
        %163 = sbr.rel (%p160) target = $region12
      $region11: #{decoder_forward.1} parent=5 // pred_region
        %s164 = ssub.s32 %s14, 1
        // Predicated region
        $region13: #{decoder_forward.1} parent=11 // pred_check
          %p165 = pneg %p61
        $region14: #{decoder_forward.1} parent=11 // pred_check_branch
          %167 = sbr.rel (%p165) target = $region16
        $region15: #{decoder_forward.1} parent=11 // pred_region
          _
        $region16: #{decoder_forward.1} parent=11 // pred_fallthru
          _
        // Predicated region
        $region17: #{decoder_forward.1} parent=11 // pred_check
          %p168 = pneg %p82
        $region18: #{decoder_forward.1} parent=11 // pred_check_branch
          %170 = sbr.rel (%p168) target = $region20
        $region19: #{decoder_forward.1} parent=11 // pred_region
          _
        $region20: #{decoder_forward.1} parent=11 // pred_fallthru
          _
        // Predicated region
        $region21: #{decoder_forward.1} parent=11 // pred_check
          %p171 = pneg %p103
        $region22: #{decoder_forward.1} parent=11 // pred_check_branch
          %173 = sbr.rel (%p171) target = $region24
        $region23: #{decoder_forward.1} parent=11 // pred_region
          _
        $region24: #{decoder_forward.1} parent=11 // pred_fallthru
          _
        // Predicated region
        $region25: #{decoder_forward.1} parent=11 // pred_check
          %p174 = pneg %p124
        $region26: #{decoder_forward.1} parent=11 // pred_check_branch
          %176 = sbr.rel (%p174) target = $region28
        $region27: #{decoder_forward.1} parent=11 // pred_region
          _
        $region28: #{decoder_forward.1} parent=11 // pred_fallthru
          _
      $region12: #{decoder_forward.1} parent=5 // pred_fallthru
        _
      %p177 = scmp.lt.s32.totalorder %s14, 2
      // Predicated region
      $region29: #{decoder_forward.1} parent=5 // pred_check
        %p178 = pneg %p177
      $region30: #{decoder_forward.1} parent=5 // pred_check_branch
        %180 = sbr.rel (%p178) target = $region32
      $region31: #{decoder_forward.1} parent=5 // pred_region
        // Predicated region
        $region33: #{decoder_forward.1} parent=31 // pred_check
          %p181 = pneg %p34
        $region34: #{decoder_forward.1} parent=31 // pred_check_branch
          %183 = sbr.rel (%p181) target = $region36
        $region35: #{decoder_forward.1} parent=31 // pred_region
          %s184 = smul.u32 32, %s14
          %p185 = scmp.lt.s32.totalorder %s184, 63
          %s186 = scalar_select %p185, %s184, 63
          %s187 = smul.addr %s186, 4
          %s188 = scalar_lea.vmem %s0, %s187
          %s189 = smul.u32 32, %s14
        $region36: #{decoder_forward.1} parent=31 // pred_fallthru
          _
      $region32: #{decoder_forward.1} parent=5 // pred_fallthru
        _
      %p190 = scmp.le.s32.totalorder 1, %s14
      %p191 = scmp.lt.s32.totalorder %s14, 3
      %p192 = pnand %p190, %p191
      %p193 = pneg %p192
      // Predicated region
      $region37: #{decoder_forward.1} parent=5 // pred_check
        _
      $region38: #{decoder_forward.1} parent=5 // pred_check_branch
        %195 = sbr.rel (%p192) target = $region40
      $region39: #{decoder_forward.1} parent=5 // pred_region
        %s196 = ssub.s32 %s14, 1
        %s197 = smul.u32 32, %s19
        %p198 = scmp.lt.s32.totalorder %s197, 63
        %s199 = scalar_select %p198, %s197, 63
        %s200 = smul.addr %s199, 4
        %s201 = scalar_lea.vmem %s0, %s200
        %p202 = pneg %p40
        %p203 = pneg %p37
        %p204 = pneg %p61
        %p205 = pneg %p58
        %p206 = pneg %p82
        %p207 = pneg %p79
        %p208 = pneg %p103
        %p209 = pneg %p100
        %p210 = pneg %p124
        %p211 = pneg %p121
        %p212 = pneg %p150
        %p213 = pneg %p147
        %s214 = sand.u32 %s137, 1
        %s215 = scalar_lea.sflag [#allocation3], %s214
        %s216 = sand.u32 %s137, 1
        %s217 = smul.addr %s216, 512
        %s218 = scalar_lea.vmem [#allocation2], %s217
        %s219 = smul.u32 32, %s19
        %p220 = scmp.lt.s32.totalorder %s219, 63
        %s221 = scalar_select %p220, %s219, 63
        %s222 = smul.addr %s221, 4
        %s223 = scalar_lea.vmem %s0, %s222
        %s224 = smul.u32 32, %s19
        %s225 = smul.u32 32, %s19
        %v227 = vld [vmem:[%s223] sm:$0xf]
        %v228 = vld [vmem:[%s223 + $0x4] sm:$0xf]
        %v229 = vld [vmem:[%s223 + $0x8] sm:$0xf]
        %v230 = vld [vmem:[%s223 + $0xc] sm:$0xf]
        %v231 = vld [vmem:[%s223 + $0x10] sm:$0xf]
        %v232 = vld [vmem:[%s223 + $0x14] sm:$0xf]
        %v233 = vld [vmem:[%s223 + $0x18] sm:$0xf]
        %v234 = vld [vmem:[%s223 + $0x1c] sm:$0xf]
        %v235 = vld [vmem:[%s223 + $0x20] sm:$0xf]
        %v236 = vld [vmem:[%s223 + $0x24] sm:$0xf]
        %v237 = vld [vmem:[%s223 + $0x28] sm:$0xf]
        %v238 = vld [vmem:[%s223 + $0x2c] sm:$0xf]
        %v239 = vld [vmem:[%s223 + $0x30] sm:$0xf]
        %v240 = vld [vmem:[%s223 + $0x34] sm:$0xf]
        %v241 = vld [vmem:[%s223 + $0x38] sm:$0xf]
        %v242 = vld [vmem:[%s223 + $0x3c] sm:$0xf]
        %v243 = vld [vmem:[%s223 + $0x40] sm:$0xf]
        %v244 = vld [vmem:[%s223 + $0x44] sm:$0xf]
        %v245 = vld [vmem:[%s223 + $0x48] sm:$0xf]
        %v246 = vld [vmem:[%s223 + $0x4c] sm:$0xf]
        %v247 = vld [vmem:[%s223 + $0x50] sm:$0xf]
        %v248 = vld [vmem:[%s223 + $0x54] sm:$0xf]
        %v249 = vld [vmem:[%s223 + $0x58] sm:$0xf]
        %v250 = vld [vmem:[%s223 + $0x5c] sm:$0xf]
        %v251 = vld [vmem:[%s223 + $0x60] sm:$0xf]
        %v252 = vld [vmem:[%s223 + $0x64] sm:$0xf]
        %v253 = vld [vmem:[%s223 + $0x68] sm:$0xf]
        %v254 = vld [vmem:[%s223 + $0x6c] sm:$0xf]
        %v255 = vld [vmem:[%s223 + $0x70] sm:$0xf]
        %v256 = vld [vmem:[%s223 + $0x74] sm:$0xf]
        %v257 = vld [vmem:[%s223 + $0x78] sm:$0xf]
        %v258 = vld [vmem:[%s223 + $0x7c] sm:$0xf]
        %v259 = vld [vmem:[%s1] sm:$0xf]
        %v260 = vld [vmem:[%s1 + $0x4] sm:$0xf]
        %v261 = vld [vmem:[%s1 + $0x8] sm:$0xf]
        %v262 = vld [vmem:[%s1 + $0xc] sm:$0xf]
        %v263 = vld [vmem:[%s1 + $0x10] sm:$0xf]
        %v264 = vld [vmem:[%s1 + $0x14] sm:$0xf]
        %v265 = vld [vmem:[%s1 + $0x18] sm:$0xf]
        %v266 = vld [vmem:[%s1 + $0x1c] sm:$0xf]
        %v267 = vld [vmem:[%s1 + $0x20] sm:$0xf]
        %v268 = vld [vmem:[%s1 + $0x24] sm:$0xf]
        %v269 = vld [vmem:[%s1 + $0x28] sm:$0xf]
        %v270 = vld [vmem:[%s1 + $0x2c] sm:$0xf]
        %v271 = vld [vmem:[%s1 + $0x30] sm:$0xf]
        %v272 = vld [vmem:[%s1 + $0x34] sm:$0xf]
        %v273 = vld [vmem:[%s1 + $0x38] sm:$0xf]
        %v274 = vld [vmem:[%s1 + $0x3c] sm:$0xf]
        %v275 = vld [vmem:[%s2] sm:$0x1]
        %v277 = vlaneseq
        %v278 = vshrl.u32 %v277, 7
        %v279 = vsub.s32 0, %v278
        %v280 = vrot.slane %v275, %v279
        %v314 = vunpack.c.l.b16 %v227
        %v315 = vunpack.c.l.b16 %v228
        %v316 = vunpack.c.l.b16 %v229
        %v317 = vunpack.c.l.b16 %v230
        %v318 = vunpack.c.l.b16 %v231
        %v319 = vunpack.c.l.b16 %v232
        %v320 = vunpack.c.l.b16 %v233
        %v321 = vunpack.c.l.b16 %v234
        %v322 = vunpack.c.l.b16 %v235
        %v323 = vunpack.c.l.b16 %v236
        %v324 = vunpack.c.l.b16 %v237
        %v325 = vunpack.c.l.b16 %v238
        %v326 = vunpack.c.l.b16 %v239
        %v327 = vunpack.c.l.b16 %v240
        %v328 = vunpack.c.l.b16 %v241
        %v329 = vunpack.c.l.b16 %v242
        %v330 = vunpack.c.l.b16 %v243
        %v331 = vunpack.c.l.b16 %v244
        %v332 = vunpack.c.l.b16 %v245
        %v333 = vunpack.c.l.b16 %v246
        %v334 = vunpack.c.l.b16 %v247
        %v335 = vunpack.c.l.b16 %v248
        %v336 = vunpack.c.l.b16 %v249
        %v337 = vunpack.c.l.b16 %v250
        %v338 = vunpack.c.l.b16 %v251
        %v339 = vunpack.c.l.b16 %v252
        %v340 = vunpack.c.l.b16 %v253
        %v341 = vunpack.c.l.b16 %v254
        %v342 = vunpack.c.l.b16 %v255
        %v343 = vunpack.c.l.b16 %v256
        %v344 = vunpack.c.l.b16 %v257
        %v345 = vunpack.c.l.b16 %v258
        %v346 = vpack.c.b16 %v315, %v314
        %v347 = vpack.c.b16 %v317, %v316
        %v348 = vpack.c.b16 %v319, %v318
        %v349 = vpack.c.b16 %v321, %v320
        %v350 = vpack.c.b16 %v323, %v322
        %v351 = vpack.c.b16 %v325, %v324
        %v352 = vpack.c.b16 %v327, %v326
        %v353 = vpack.c.b16 %v329, %v328
        %v354 = vpack.c.b16 %v331, %v330
        %v355 = vpack.c.b16 %v333, %v332
        %v356 = vpack.c.b16 %v335, %v334
        %v357 = vpack.c.b16 %v337, %v336
        %v358 = vpack.c.b16 %v339, %v338
        %v359 = vpack.c.b16 %v341, %v340
        %v360 = vpack.c.b16 %v343, %v342
        %v361 = vpack.c.b16 %v345, %v344
        %v378 = vunpack.c.l.b16 %v259
        %v379 = vunpack.c.l.b16 %v260
        %v380 = vunpack.c.l.b16 %v261
        %v381 = vunpack.c.l.b16 %v262
        %v382 = vunpack.c.l.b16 %v263
        %v383 = vunpack.c.l.b16 %v264
        %v384 = vunpack.c.l.b16 %v265
        %v385 = vunpack.c.l.b16 %v266
        %v386 = vunpack.c.l.b16 %v267
        %v387 = vunpack.c.l.b16 %v268
        %v388 = vunpack.c.l.b16 %v269
        %v389 = vunpack.c.l.b16 %v270
        %v390 = vunpack.c.l.b16 %v271
        %v391 = vunpack.c.l.b16 %v272
        %v392 = vunpack.c.l.b16 %v273
        %v393 = vunpack.c.l.b16 %v274
        %v394 = vpack.c.b16 %v379, %v378
        %v395 = vpack.c.b16 %v381, %v380
        %v396 = vpack.c.b16 %v383, %v382
        %v397 = vpack.c.b16 %v385, %v384
        %v398 = vpack.c.b16 %v387, %v386
        %v399 = vpack.c.b16 %v389, %v388
        %v400 = vpack.c.b16 %v391, %v390
        %v401 = vpack.c.b16 %v393, %v392
        %vm402 = vcmask 523264
        %v404 = vsel %vm402, %v346, 0
        %v407 = vsel %vm402, %v347, 0
        %v410 = vsel %vm402, %v348, 0
        %v413 = vsel %vm402, %v349, 0
        %v416 = vsel %vm402, %v350, 0
        %v419 = vsel %vm402, %v351, 0
        %v422 = vsel %vm402, %v352, 0
        %v425 = vsel %vm402, %v353, 0
        %v428 = vsel %vm402, %v354, 0
        %v431 = vsel %vm402, %v355, 0
        %v434 = vsel %vm402, %v356, 0
        %v437 = vsel %vm402, %v357, 0
        %v440 = vsel %vm402, %v358, 0
        %v443 = vsel %vm402, %v359, 0
        %v446 = vsel %vm402, %v360, 0
        %v449 = vsel %vm402, %v361, 0
        %v452 = vsel %vm402, %v394, 0
        %v455 = vsel %vm402, %v395, 0
        %v458 = vsel %vm402, %v396, 0
        %v461 = vsel %vm402, %v397, 0
        %v464 = vsel %vm402, %v398, 0
        %v467 = vsel %vm402, %v399, 0
        %v470 = vsel %vm402, %v400, 0
        %v473 = vsel %vm402, %v401, 0
        %475 = vmatprep.subr.bf16.mxu0 0
        %476 = vmatpush1.bf16.xpose.msra.mxu0 %v473
        %477 = vmatprep.subr.bf16.mxu0 0
        %478 = vmatpush1.bf16.xpose.msra.mxu0 %v470
        %479 = vmatprep.subr.bf16.mxu0 0
        %480 = vmatpush1.bf16.xpose.msra.mxu0 %v467
        %481 = vmatprep.subr.bf16.mxu0 0
        %482 = vmatpush1.bf16.xpose.msra.mxu0 %v464
        %483 = vmatprep.subr.bf16.mxu0 0
        %484 = vmatpush1.bf16.xpose.msra.mxu0 %v461
        %485 = vmatprep.subr.bf16.mxu0 0
        %486 = vmatpush1.bf16.xpose.msra.mxu0 %v458
        %487 = vmatprep.subr.bf16.mxu0 0
        %488 = vmatpush1.bf16.xpose.msra.mxu0 %v455
        %489 = vmatprep.subr.bf16.mxu0 0
        %490 = vmatpush1.bf16.xpose.msra.mxu0 %v452
        %491 = vmatprep.subr.bf16.mxu0 0
        %492 = vmatpush2.bf16.xpose.msra.mxu0 0
        %493 = vmatprep.subr.bf16.mxu0 0
        %494 = vmatpush2.bf16.xpose.msra.mxu0 0
        %495 = vmatprep.subr.bf16.mxu0 0
        %496 = vmatpush2.bf16.xpose.msra.mxu0 0
        %497 = vmatprep.subr.bf16.mxu0 0
        %498 = vmatpush2.bf16.xpose.msra.mxu0 0
        %499 = vmatprep.subr.bf16.mxu0 0
        %500 = vmatpush2.bf16.xpose.msra.mxu0 0
        %501 = vmatprep.subr.bf16.mxu0 0
        %502 = vmatpush2.bf16.xpose.msra.mxu0 0
        %503 = vmatprep.subr.bf16.mxu0 0
        %504 = vmatpush2.bf16.xpose.msra.mxu0 0
        %505 = vmatprep.subr.bf16.mxu0 0
        %506 = vmatpush2.bf16.xpose.msra.mxu0 0
        %507 = vmatprep.mubr.bf16.mxu0 0
        %508 = vmatmul.mubr.bf16.gmra.mxu0 %v404
        %v509 = vpop.f32.mrf.mxu0
        %v510 = vadd.f32 %v280, %v509
        %v511 = vpop.f32.mrf.mxu0
        %v512 = vpop.f32.mrf.mxu0
        %v513 = vadd.f32 %v280, %v512
        %v514 = vpop.f32.mrf.mxu0
        %515 = vmatprep.mubr.bf16.mxu0 0
        %516 = vmatmul.mubr.bf16.gmra.mxu0 %v407
        %v517 = vpop.f32.mrf.mxu0
        %v518 = vadd.f32 %v280, %v517
        %v519 = vpop.f32.mrf.mxu0
        %v520 = vpop.f32.mrf.mxu0
        %v521 = vadd.f32 %v280, %v520
        %v522 = vpop.f32.mrf.mxu0
        %523 = vmatprep.mubr.bf16.mxu0 0
        %524 = vmatmul.mubr.bf16.gmra.mxu0 %v410
        %v525 = vpop.f32.mrf.mxu0
        %v526 = vadd.f32 %v280, %v525
        %v527 = vpop.f32.mrf.mxu0
        %v528 = vpop.f32.mrf.mxu0
        %v529 = vadd.f32 %v280, %v528
        %v530 = vpop.f32.mrf.mxu0
        %531 = vmatprep.mubr.bf16.mxu0 0
        %532 = vmatmul.mubr.bf16.gmra.mxu0 %v413
        %v533 = vpop.f32.mrf.mxu0
        %v534 = vadd.f32 %v280, %v533
        %v535 = vpop.f32.mrf.mxu0
        %v536 = vpop.f32.mrf.mxu0
        %v537 = vadd.f32 %v280, %v536
        %v538 = vpop.f32.mrf.mxu0
        %539 = vmatprep.mubr.bf16.mxu0 0
        %540 = vmatmul.mubr.bf16.gmra.mxu0 %v416
        %v541 = vpop.f32.mrf.mxu0
        %v542 = vadd.f32 %v280, %v541
        %v543 = vpop.f32.mrf.mxu0
        %v544 = vpop.f32.mrf.mxu0
        %v545 = vadd.f32 %v280, %v544
        %v546 = vpop.f32.mrf.mxu0
        %547 = vmatprep.mubr.bf16.mxu0 0
        %548 = vmatmul.mubr.bf16.gmra.mxu0 %v419
        %v549 = vpop.f32.mrf.mxu0
        %v550 = vadd.f32 %v280, %v549
        %v551 = vpop.f32.mrf.mxu0
        %v552 = vpop.f32.mrf.mxu0
        %v553 = vadd.f32 %v280, %v552
        %v554 = vpop.f32.mrf.mxu0
        %555 = vmatprep.mubr.bf16.mxu0 0
        %556 = vmatmul.mubr.bf16.gmra.mxu0 %v422
        %v557 = vpop.f32.mrf.mxu0
        %v558 = vadd.f32 %v280, %v557
        %v559 = vpop.f32.mrf.mxu0
        %v560 = vpop.f32.mrf.mxu0
        %v561 = vadd.f32 %v280, %v560
        %v562 = vpop.f32.mrf.mxu0
        %563 = vmatprep.mubr.bf16.mxu0 0
        %564 = vmatmul.mubr.bf16.gmra.mxu0 %v425
        %v565 = vpop.f32.mrf.mxu0
        %v566 = vadd.f32 %v280, %v565
        %v567 = vpop.f32.mrf.mxu0
        %v568 = vpop.f32.mrf.mxu0
        %v569 = vadd.f32 %v280, %v568
        %v570 = vpop.f32.mrf.mxu0
        %571 = vmatprep.mubr.bf16.mxu0 0
        %572 = vmatmul.mubr.bf16.gmra.mxu0 %v428
        %v573 = vpop.f32.mrf.mxu0
        %v574 = vadd.f32 %v280, %v573
        %v575 = vpop.f32.mrf.mxu0
        %v576 = vpop.f32.mrf.mxu0
        %v577 = vadd.f32 %v280, %v576
        %v578 = vpop.f32.mrf.mxu0
        %579 = vmatprep.mubr.bf16.mxu0 0
        %580 = vmatmul.mubr.bf16.gmra.mxu0 %v431
        %v581 = vpop.f32.mrf.mxu0
        %v582 = vadd.f32 %v280, %v581
        %v583 = vpop.f32.mrf.mxu0
        %v584 = vpop.f32.mrf.mxu0
        %v585 = vadd.f32 %v280, %v584
        %v586 = vpop.f32.mrf.mxu0
        %587 = vmatprep.mubr.bf16.mxu0 0
        %588 = vmatmul.mubr.bf16.gmra.mxu0 %v434
        %v589 = vpop.f32.mrf.mxu0
        %v590 = vadd.f32 %v280, %v589
        %v591 = vpop.f32.mrf.mxu0
        %v592 = vpop.f32.mrf.mxu0
        %v593 = vadd.f32 %v280, %v592
        %v594 = vpop.f32.mrf.mxu0
        %595 = vmatprep.mubr.bf16.mxu0 0
        %596 = vmatmul.mubr.bf16.gmra.mxu0 %v437
        %v597 = vpop.f32.mrf.mxu0
        %v598 = vadd.f32 %v280, %v597
        %v599 = vpop.f32.mrf.mxu0
        %v600 = vpop.f32.mrf.mxu0
        %v601 = vadd.f32 %v280, %v600
        %v602 = vpop.f32.mrf.mxu0
        %603 = vmatprep.mubr.bf16.mxu0 0
        %604 = vmatmul.mubr.bf16.gmra.mxu0 %v440
        %v605 = vpop.f32.mrf.mxu0
        %v606 = vadd.f32 %v280, %v605
        %v607 = vpop.f32.mrf.mxu0
        %v608 = vpop.f32.mrf.mxu0
        %v609 = vadd.f32 %v280, %v608
        %v610 = vpop.f32.mrf.mxu0
        %611 = vmatprep.mubr.bf16.mxu0 0
        %612 = vmatmul.mubr.bf16.gmra.mxu0 %v443
        %v613 = vpop.f32.mrf.mxu0
        %v614 = vadd.f32 %v280, %v613
        %v615 = vpop.f32.mrf.mxu0
        %v616 = vpop.f32.mrf.mxu0
        %v617 = vadd.f32 %v280, %v616
        %v618 = vpop.f32.mrf.mxu0
        %619 = vmatprep.mubr.bf16.mxu0 0
        %620 = vmatmul.mubr.bf16.gmra.mxu0 %v446
        %v621 = vpop.f32.mrf.mxu0
        %v622 = vadd.f32 %v280, %v621
        %v623 = vpop.f32.mrf.mxu0
        %v624 = vpop.f32.mrf.mxu0
        %v625 = vadd.f32 %v280, %v624
        %v626 = vpop.f32.mrf.mxu0
        %627 = vmatprep.mubr.bf16.mxu0 0
        %628 = vmatmul.mubr.bf16.gmra.mxu0 %v449
        %v629 = vpop.f32.mrf.mxu0
        %v630 = vadd.f32 %v280, %v629
        %v631 = vpop.f32.mrf.mxu0
        %v632 = vpop.f32.mrf.mxu0
        %v633 = vadd.f32 %v280, %v632
        %v634 = vpop.f32.mrf.mxu0
        %635 = vdwg.mxu0
        %v636 = vmul.f32 %v510, 0.5
        %v637 = vmul.f32 %v513, 0.5
        %v638 = vmul.f32 %v518, 0.5
        %v639 = vmul.f32 %v521, 0.5
        %v640 = vmul.f32 %v526, 0.5
        %v641 = vmul.f32 %v529, 0.5
        %v642 = vmul.f32 %v534, 0.5
        %v643 = vmul.f32 %v537, 0.5
        %v644 = vmul.f32 %v542, 0.5
        %v645 = vmul.f32 %v545, 0.5
        %v646 = vmul.f32 %v550, 0.5
        %v647 = vmul.f32 %v553, 0.5
        %v648 = vmul.f32 %v558, 0.5
        %v649 = vmul.f32 %v561, 0.5
        %v650 = vmul.f32 %v566, 0.5
        %v651 = vmul.f32 %v569, 0.5
        %v652 = vmul.f32 %v574, 0.5
        %v653 = vmul.f32 %v577, 0.5
        %v654 = vmul.f32 %v582, 0.5
        %v655 = vmul.f32 %v585, 0.5
        %v656 = vmul.f32 %v590, 0.5
        %v657 = vmul.f32 %v593, 0.5
        %v658 = vmul.f32 %v598, 0.5
        %v659 = vmul.f32 %v601, 0.5
        %v660 = vmul.f32 %v606, 0.5
        %v661 = vmul.f32 %v609, 0.5
        %v662 = vmul.f32 %v614, 0.5
        %v663 = vmul.f32 %v617, 0.5
        %v664 = vmul.f32 %v622, 0.5
        %v665 = vmul.f32 %v625, 0.5
        %v666 = vmul.f32 %v630, 0.5
        %v667 = vmul.f32 %v633, 0.5
        %v668 = vtanh.pop %v636
        %v669 = vtanh.pop %v637
        %v670 = vtanh.pop %v638
        %v671 = vtanh.pop %v639
        %v672 = vtanh.pop %v640
        %v673 = vtanh.pop %v641
        %v674 = vtanh.pop %v642
        %v675 = vtanh.pop %v643
        %v676 = vtanh.pop %v644
        %v677 = vtanh.pop %v645
        %v678 = vtanh.pop %v646
        %v679 = vtanh.pop %v647
        %v680 = vtanh.pop %v648
        %v681 = vtanh.pop %v649
        %v682 = vtanh.pop %v650
        %v683 = vtanh.pop %v651
        %v684 = vtanh.pop %v652
        %v685 = vtanh.pop %v653
        %v686 = vtanh.pop %v654
        %v687 = vtanh.pop %v655
        %v688 = vtanh.pop %v656
        %v689 = vtanh.pop %v657
        %v690 = vtanh.pop %v658
        %v691 = vtanh.pop %v659
        %v692 = vtanh.pop %v660
        %v693 = vtanh.pop %v661
        %v694 = vtanh.pop %v662
        %v695 = vtanh.pop %v663
        %v696 = vtanh.pop %v664
        %v697 = vtanh.pop %v665
        %v698 = vtanh.pop %v666
        %v699 = vtanh.pop %v667
        %v700 = vmul.f32 %v668, 0.5
        %v701 = vmul.f32 %v669, 0.5
        %v702 = vmul.f32 %v670, 0.5
        %v703 = vmul.f32 %v671, 0.5
        %v704 = vmul.f32 %v672, 0.5
        %v705 = vmul.f32 %v673, 0.5
        %v706 = vmul.f32 %v674, 0.5
        %v707 = vmul.f32 %v675, 0.5
        %v708 = vmul.f32 %v676, 0.5
        %v709 = vmul.f32 %v677, 0.5
        %v710 = vmul.f32 %v678, 0.5
        %v711 = vmul.f32 %v679, 0.5
        %v712 = vmul.f32 %v680, 0.5
        %v713 = vmul.f32 %v681, 0.5
        %v714 = vmul.f32 %v682, 0.5
        %v715 = vmul.f32 %v683, 0.5
        %v716 = vmul.f32 %v684, 0.5
        %v717 = vmul.f32 %v685, 0.5
        %v718 = vmul.f32 %v686, 0.5
        %v719 = vmul.f32 %v687, 0.5
        %v720 = vmul.f32 %v688, 0.5
        %v721 = vmul.f32 %v689, 0.5
        %v722 = vmul.f32 %v690, 0.5
        %v723 = vmul.f32 %v691, 0.5
        %v724 = vmul.f32 %v692, 0.5
        %v725 = vmul.f32 %v693, 0.5
        %v726 = vmul.f32 %v694, 0.5
        %v727 = vmul.f32 %v695, 0.5
        %v728 = vmul.f32 %v696, 0.5
        %v729 = vmul.f32 %v697, 0.5
        %v730 = vmul.f32 %v698, 0.5
        %v731 = vmul.f32 %v699, 0.5
        %v732 = vadd.f32 %v700, 0.5
        %v733 = vadd.f32 %v701, 0.5
        %v734 = vadd.f32 %v702, 0.5
        %v735 = vadd.f32 %v703, 0.5
        %v736 = vadd.f32 %v704, 0.5
        %v737 = vadd.f32 %v705, 0.5
        %v738 = vadd.f32 %v706, 0.5
        %v739 = vadd.f32 %v707, 0.5
        %v740 = vadd.f32 %v708, 0.5
        %v741 = vadd.f32 %v709, 0.5
        %v742 = vadd.f32 %v710, 0.5
        %v743 = vadd.f32 %v711, 0.5
        %v744 = vadd.f32 %v712, 0.5
        %v745 = vadd.f32 %v713, 0.5
        %v746 = vadd.f32 %v714, 0.5
        %v747 = vadd.f32 %v715, 0.5
        %v748 = vadd.f32 %v716, 0.5
        %v749 = vadd.f32 %v717, 0.5
        %v750 = vadd.f32 %v718, 0.5
        %v751 = vadd.f32 %v719, 0.5
        %v752 = vadd.f32 %v720, 0.5
        %v753 = vadd.f32 %v721, 0.5
        %v754 = vadd.f32 %v722, 0.5
        %v755 = vadd.f32 %v723, 0.5
        %v756 = vadd.f32 %v724, 0.5
        %v757 = vadd.f32 %v725, 0.5
        %v758 = vadd.f32 %v726, 0.5
        %v759 = vadd.f32 %v727, 0.5
        %v760 = vadd.f32 %v728, 0.5
        %v761 = vadd.f32 %v729, 0.5
        %v762 = vadd.f32 %v730, 0.5
        %v763 = vadd.f32 %v731, 0.5
        %v764 = vpack.c.bf16 %v733, %v732
        %v765 = vpack.c.bf16 %v735, %v734
        %v766 = vpack.c.bf16 %v737, %v736
        %v767 = vpack.c.bf16 %v739, %v738
        %v768 = vpack.c.bf16 %v741, %v740
        %v769 = vpack.c.bf16 %v743, %v742
        %v770 = vpack.c.bf16 %v745, %v744
        %v771 = vpack.c.bf16 %v747, %v746
        %v772 = vpack.c.bf16 %v749, %v748
        %v773 = vpack.c.bf16 %v751, %v750
        %v774 = vpack.c.bf16 %v753, %v752
        %v775 = vpack.c.bf16 %v755, %v754
        %v776 = vpack.c.bf16 %v757, %v756
        %v777 = vpack.c.bf16 %v759, %v758
        %v778 = vpack.c.bf16 %v761, %v760
        %v779 = vpack.c.bf16 %v763, %v762
        %v780 = vld [vmem:[%s3] sm:$0xf]
        %v781 = vld [vmem:[%s3 + $0x4] sm:$0xf]
        %v782 = vld [vmem:[%s3 + $0x8] sm:$0xf]
        %v783 = vld [vmem:[%s3 + $0xc] sm:$0xf]
        %v784 = vld [vmem:[%s3 + $0x10] sm:$0xf]
        %v785 = vld [vmem:[%s3 + $0x14] sm:$0xf]
        %v786 = vld [vmem:[%s3 + $0x18] sm:$0xf]
        %v787 = vld [vmem:[%s3 + $0x1c] sm:$0xf]
        %v788 = vld [vmem:[%s3 + $0x20] sm:$0xf]
        %v789 = vld [vmem:[%s3 + $0x24] sm:$0xf]
        %v790 = vld [vmem:[%s3 + $0x28] sm:$0xf]
        %v791 = vld [vmem:[%s3 + $0x2c] sm:$0xf]
        %v792 = vld [vmem:[%s3 + $0x30] sm:$0xf]
        %v793 = vld [vmem:[%s3 + $0x34] sm:$0xf]
        %v794 = vld [vmem:[%s3 + $0x38] sm:$0xf]
        %v795 = vld [vmem:[%s3 + $0x3c] sm:$0xf]
        %v796 = vld [vmem:[%s3 + $0x40] sm:$0xf]
        %v797 = vld [vmem:[%s3 + $0x44] sm:$0xf]
        %v798 = vld [vmem:[%s3 + $0x48] sm:$0xf]
        %v799 = vld [vmem:[%s3 + $0x4c] sm:$0xf]
        %v800 = vld [vmem:[%s3 + $0x50] sm:$0xf]
        %v801 = vld [vmem:[%s3 + $0x54] sm:$0xf]
        %v802 = vld [vmem:[%s3 + $0x58] sm:$0xf]
        %v803 = vld [vmem:[%s3 + $0x5c] sm:$0xf]
        %v804 = vld [vmem:[%s3 + $0x60] sm:$0xf]
        %v805 = vld [vmem:[%s3 + $0x64] sm:$0xf]
        %v806 = vld [vmem:[%s3 + $0x68] sm:$0xf]
        %v807 = vld [vmem:[%s3 + $0x6c] sm:$0xf]
        %v808 = vld [vmem:[%s3 + $0x70] sm:$0xf]
        %v809 = vld [vmem:[%s3 + $0x74] sm:$0xf]
        %v810 = vld [vmem:[%s3 + $0x78] sm:$0xf]
        %v811 = vld [vmem:[%s3 + $0x7c] sm:$0xf]
        %v812 = vld [vmem:[%s4] sm:$0x3]
        %v814 = vlaneseq
        %v815 = vshrl.u32 %v814, 7
        %v816 = vsub.s32 0, %v815
        %v817 = vrot.slane %v812, %v816
        %v818 = vlaneseq
        %v819 = vshrl.u32 %v818, 7
        %v820 = vsub.s32 1, %v819
        %v821 = vrot.slane %v812, %v820
        %v856 = vunpack.c.l.b16 %v780
        %v857 = vunpack.c.l.b16 %v781
        %v858 = vunpack.c.l.b16 %v782
        %v859 = vunpack.c.l.b16 %v783
        %v860 = vunpack.c.l.b16 %v784
        %v861 = vunpack.c.l.b16 %v785
        %v862 = vunpack.c.l.b16 %v786
        %v863 = vunpack.c.l.b16 %v787
        %v864 = vunpack.c.l.b16 %v788
        %v865 = vunpack.c.l.b16 %v789
        %v866 = vunpack.c.l.b16 %v790
        %v867 = vunpack.c.l.b16 %v791
        %v868 = vunpack.c.l.b16 %v792
        %v869 = vunpack.c.l.b16 %v793
        %v870 = vunpack.c.l.b16 %v794
        %v871 = vunpack.c.l.b16 %v795
        %v872 = vunpack.c.l.b16 %v796
        %v873 = vunpack.c.l.b16 %v797
        %v874 = vunpack.c.l.b16 %v798
        %v875 = vunpack.c.l.b16 %v799
        %v876 = vunpack.c.l.b16 %v800
        %v877 = vunpack.c.l.b16 %v801
        %v878 = vunpack.c.l.b16 %v802
        %v879 = vunpack.c.l.b16 %v803
        %v880 = vunpack.c.l.b16 %v804
        %v881 = vunpack.c.l.b16 %v805
        %v882 = vunpack.c.l.b16 %v806
        %v883 = vunpack.c.l.b16 %v807
        %v884 = vunpack.c.l.b16 %v808
        %v885 = vunpack.c.l.b16 %v809
        %v886 = vunpack.c.l.b16 %v810
        %v887 = vunpack.c.l.b16 %v811
        %v888 = vpack.c.b16 %v857, %v856
        %v889 = vpack.c.b16 %v859, %v858
        %v890 = vpack.c.b16 %v861, %v860
        %v891 = vpack.c.b16 %v863, %v862
        %v892 = vpack.c.b16 %v865, %v864
        %v893 = vpack.c.b16 %v867, %v866
        %v894 = vpack.c.b16 %v869, %v868
        %v895 = vpack.c.b16 %v871, %v870
        %v896 = vpack.c.b16 %v873, %v872
        %v897 = vpack.c.b16 %v875, %v874
        %v898 = vpack.c.b16 %v877, %v876
        %v899 = vpack.c.b16 %v879, %v878
        %v900 = vpack.c.b16 %v881, %v880
        %v901 = vpack.c.b16 %v883, %v882
        %v902 = vpack.c.b16 %v885, %v884
        %v903 = vpack.c.b16 %v887, %v886
        %920 = vmatprep.subr.bf16.mxu0 0
        %921 = vmatpush1.bf16.xpose.msra.mxu0 %v895
        %922 = vmatprep.subr.bf16.mxu0 0
        %923 = vmatpush1.bf16.xpose.msra.mxu0 %v894
        %924 = vmatprep.subr.bf16.mxu0 0
        %925 = vmatpush1.bf16.xpose.msra.mxu0 %v893
        %926 = vmatprep.subr.bf16.mxu0 0
        %927 = vmatpush1.bf16.xpose.msra.mxu0 %v892
        %928 = vmatprep.subr.bf16.mxu0 0
        %929 = vmatpush1.bf16.xpose.msra.mxu0 %v891
        %930 = vmatprep.subr.bf16.mxu0 0
        %931 = vmatpush1.bf16.xpose.msra.mxu0 %v890
        %932 = vmatprep.subr.bf16.mxu0 0
        %933 = vmatpush1.bf16.xpose.msra.mxu0 %v889
        %934 = vmatprep.subr.bf16.mxu0 0
        %935 = vmatpush1.bf16.xpose.msra.mxu0 %v888
        %936 = vmatprep.subr.bf16.mxu0 0
        %937 = vmatpush2.bf16.xpose.msra.mxu0 %v903
        %938 = vmatprep.subr.bf16.mxu0 0
        %939 = vmatpush2.bf16.xpose.msra.mxu0 %v902
        %940 = vmatprep.subr.bf16.mxu0 0
        %941 = vmatpush2.bf16.xpose.msra.mxu0 %v901
        %942 = vmatprep.subr.bf16.mxu0 0
        %943 = vmatpush2.bf16.xpose.msra.mxu0 %v900
        %944 = vmatprep.subr.bf16.mxu0 0
        %945 = vmatpush2.bf16.xpose.msra.mxu0 %v899
        %946 = vmatprep.subr.bf16.mxu0 0
        %947 = vmatpush2.bf16.xpose.msra.mxu0 %v898
        %948 = vmatprep.subr.bf16.mxu0 0
        %949 = vmatpush2.bf16.xpose.msra.mxu0 %v897
        %950 = vmatprep.subr.bf16.mxu0 0
        %951 = vmatpush2.bf16.xpose.msra.mxu0 %v896
        %952 = vmatprep.mubr.bf16.mxu0 0
        %953 = vmatmul.mubr.bf16.gmra.mxu0 %v764
        %v954 = vpop.f32.mrf.mxu0
        %v955 = vadd.f32 %v817, %v954
        %v956 = vpop.f32.mrf.mxu0
        %v957 = vadd.f32 %v821, %v956
        %v958 = vpop.f32.mrf.mxu0
        %v959 = vadd.f32 %v817, %v958
        %v960 = vpop.f32.mrf.mxu0
        %v961 = vadd.f32 %v821, %v960
        %962 = vmatprep.mubr.bf16.mxu0 0
        %963 = vmatmul.mubr.bf16.gmra.mxu0 %v765
        %v964 = vpop.f32.mrf.mxu0
        %v965 = vadd.f32 %v817, %v964
        %v966 = vpop.f32.mrf.mxu0
        %v967 = vadd.f32 %v821, %v966
        %v968 = vpop.f32.mrf.mxu0
        %v969 = vadd.f32 %v817, %v968
        %v970 = vpop.f32.mrf.mxu0
        %v971 = vadd.f32 %v821, %v970
        %972 = vmatprep.mubr.bf16.mxu0 0
        %973 = vmatmul.mubr.bf16.gmra.mxu0 %v766
        %v974 = vpop.f32.mrf.mxu0
        %v975 = vadd.f32 %v817, %v974
        %v976 = vpop.f32.mrf.mxu0
        %v977 = vadd.f32 %v821, %v976
        %v978 = vpop.f32.mrf.mxu0
        %v979 = vadd.f32 %v817, %v978
        %v980 = vpop.f32.mrf.mxu0
        %v981 = vadd.f32 %v821, %v980
        %982 = vmatprep.mubr.bf16.mxu0 0
        %983 = vmatmul.mubr.bf16.gmra.mxu0 %v767
        %v984 = vpop.f32.mrf.mxu0
        %v985 = vadd.f32 %v817, %v984
        %v986 = vpop.f32.mrf.mxu0
        %v987 = vadd.f32 %v821, %v986
        %v988 = vpop.f32.mrf.mxu0
        %v989 = vadd.f32 %v817, %v988
        %v990 = vpop.f32.mrf.mxu0
        %v991 = vadd.f32 %v821, %v990
        %992 = vmatprep.mubr.bf16.mxu0 0
        %993 = vmatmul.mubr.bf16.gmra.mxu0 %v768
        %v994 = vpop.f32.mrf.mxu0
        %v995 = vadd.f32 %v817, %v994
        %v996 = vpop.f32.mrf.mxu0
        %v997 = vadd.f32 %v821, %v996
        %v998 = vpop.f32.mrf.mxu0
        %v999 = vadd.f32 %v817, %v998
        %v1000 = vpop.f32.mrf.mxu0
        %v1001 = vadd.f32 %v821, %v1000
        %1002 = vmatprep.mubr.bf16.mxu0 0
        %1003 = vmatmul.mubr.bf16.gmra.mxu0 %v769
        %v1004 = vpop.f32.mrf.mxu0
        %v1005 = vadd.f32 %v817, %v1004
        %v1006 = vpop.f32.mrf.mxu0
        %v1007 = vadd.f32 %v821, %v1006
        %v1008 = vpop.f32.mrf.mxu0
        %v1009 = vadd.f32 %v817, %v1008
        %v1010 = vpop.f32.mrf.mxu0
        %v1011 = vadd.f32 %v821, %v1010
        %1012 = vmatprep.mubr.bf16.mxu0 0
        %1013 = vmatmul.mubr.bf16.gmra.mxu0 %v770
        %v1014 = vpop.f32.mrf.mxu0
        %v1015 = vadd.f32 %v817, %v1014
        %v1016 = vpop.f32.mrf.mxu0
        %v1017 = vadd.f32 %v821, %v1016
        %v1018 = vpop.f32.mrf.mxu0
        %v1019 = vadd.f32 %v817, %v1018
        %v1020 = vpop.f32.mrf.mxu0
        %v1021 = vadd.f32 %v821, %v1020
        %1022 = vmatprep.mubr.bf16.mxu0 0
        %1023 = vmatmul.mubr.bf16.gmra.mxu0 %v771
        %v1024 = vpop.f32.mrf.mxu0
        %v1025 = vadd.f32 %v817, %v1024
        %v1026 = vpop.f32.mrf.mxu0
        %v1027 = vadd.f32 %v821, %v1026
        %v1028 = vpop.f32.mrf.mxu0
        %v1029 = vadd.f32 %v817, %v1028
        %v1030 = vpop.f32.mrf.mxu0
        %v1031 = vadd.f32 %v821, %v1030
        %1032 = vmatprep.mubr.bf16.mxu0 0
        %1033 = vmatmul.mubr.bf16.gmra.mxu0 %v772
        %v1034 = vpop.f32.mrf.mxu0
        %v1035 = vadd.f32 %v817, %v1034
        %v1036 = vpop.f32.mrf.mxu0
        %v1037 = vadd.f32 %v821, %v1036
        %v1038 = vpop.f32.mrf.mxu0
        %v1039 = vadd.f32 %v817, %v1038
        %v1040 = vpop.f32.mrf.mxu0
        %v1041 = vadd.f32 %v821, %v1040
        %1042 = vmatprep.mubr.bf16.mxu0 0
        %1043 = vmatmul.mubr.bf16.gmra.mxu0 %v773
        %v1044 = vpop.f32.mrf.mxu0
        %v1045 = vadd.f32 %v817, %v1044
        %v1046 = vpop.f32.mrf.mxu0
        %v1047 = vadd.f32 %v821, %v1046
        %v1048 = vpop.f32.mrf.mxu0
        %v1049 = vadd.f32 %v817, %v1048
        %v1050 = vpop.f32.mrf.mxu0
        %v1051 = vadd.f32 %v821, %v1050
        %1052 = vmatprep.mubr.bf16.mxu0 0
        %1053 = vmatmul.mubr.bf16.gmra.mxu0 %v774
        %v1054 = vpop.f32.mrf.mxu0
        %v1055 = vadd.f32 %v817, %v1054
        %v1056 = vpop.f32.mrf.mxu0
        %v1057 = vadd.f32 %v821, %v1056
        %v1058 = vpop.f32.mrf.mxu0
        %v1059 = vadd.f32 %v817, %v1058
        %v1060 = vpop.f32.mrf.mxu0
        %v1061 = vadd.f32 %v821, %v1060
        %1062 = vmatprep.mubr.bf16.mxu0 0
        %1063 = vmatmul.mubr.bf16.gmra.mxu0 %v775
        %v1064 = vpop.f32.mrf.mxu0
        %v1065 = vadd.f32 %v817, %v1064
        %v1066 = vpop.f32.mrf.mxu0
        %v1067 = vadd.f32 %v821, %v1066
        %v1068 = vpop.f32.mrf.mxu0
        %v1069 = vadd.f32 %v817, %v1068
        %v1070 = vpop.f32.mrf.mxu0
        %v1071 = vadd.f32 %v821, %v1070
        %1072 = vmatprep.mubr.bf16.mxu0 0
        %1073 = vmatmul.mubr.bf16.gmra.mxu0 %v776
        %v1074 = vpop.f32.mrf.mxu0
        %v1075 = vadd.f32 %v817, %v1074
        %v1076 = vpop.f32.mrf.mxu0
        %v1077 = vadd.f32 %v821, %v1076
        %v1078 = vpop.f32.mrf.mxu0
        %v1079 = vadd.f32 %v817, %v1078
        %v1080 = vpop.f32.mrf.mxu0
        %v1081 = vadd.f32 %v821, %v1080
        %1082 = vmatprep.mubr.bf16.mxu0 0
        %1083 = vmatmul.mubr.bf16.gmra.mxu0 %v777
        %v1084 = vpop.f32.mrf.mxu0
        %v1085 = vadd.f32 %v817, %v1084
        %v1086 = vpop.f32.mrf.mxu0
        %v1087 = vadd.f32 %v821, %v1086
        %v1088 = vpop.f32.mrf.mxu0
        %v1089 = vadd.f32 %v817, %v1088
        %v1090 = vpop.f32.mrf.mxu0
        %v1091 = vadd.f32 %v821, %v1090
        %1092 = vmatprep.mubr.bf16.mxu0 0
        %1093 = vmatmul.mubr.bf16.gmra.mxu0 %v778
        %v1094 = vpop.f32.mrf.mxu0
        %v1095 = vadd.f32 %v817, %v1094
        %v1096 = vpop.f32.mrf.mxu0
        %v1097 = vadd.f32 %v821, %v1096
        %v1098 = vpop.f32.mrf.mxu0
        %v1099 = vadd.f32 %v817, %v1098
        %v1100 = vpop.f32.mrf.mxu0
        %v1101 = vadd.f32 %v821, %v1100
        %1102 = vmatprep.mubr.bf16.mxu0 0
        %1103 = vmatmul.mubr.bf16.gmra.mxu0 %v779
        %v1104 = vpop.f32.mrf.mxu0
        %v1105 = vadd.f32 %v817, %v1104
        %v1106 = vpop.f32.mrf.mxu0
        %v1107 = vadd.f32 %v821, %v1106
        %v1108 = vpop.f32.mrf.mxu0
        %v1109 = vadd.f32 %v817, %v1108
        %v1110 = vpop.f32.mrf.mxu0
        %v1111 = vadd.f32 %v821, %v1110
        %1112 = vdwg.mxu0
        %1113 = vst [vmem:[%s218] sm:$0xff] %v955
        %1114 = vst [vmem:[%s218 + $0x8] sm:$0xff] %v957
        %1115 = vst [vmem:[%s218 + $0x10] sm:$0xff] %v959
        %1116 = vst [vmem:[%s218 + $0x18] sm:$0xff] %v961
        %1117 = vst [vmem:[%s218 + $0x20] sm:$0xff] %v965
        %1118 = vst [vmem:[%s218 + $0x28] sm:$0xff] %v967
        %1119 = vst [vmem:[%s218 + $0x30] sm:$0xff] %v969
        %1120 = vst [vmem:[%s218 + $0x38] sm:$0xff] %v971
        %1121 = vst [vmem:[%s218 + $0x40] sm:$0xff] %v975
        %1122 = vst [vmem:[%s218 + $0x48] sm:$0xff] %v977
        %1123 = vst [vmem:[%s218 + $0x50] sm:$0xff] %v979
        %1124 = vst [vmem:[%s218 + $0x58] sm:$0xff] %v981
        %1125 = vst [vmem:[%s218 + $0x60] sm:$0xff] %v985
        %1126 = vst [vmem:[%s218 + $0x68] sm:$0xff] %v987
        %1127 = vst [vmem:[%s218 + $0x70] sm:$0xff] %v989
        %1128 = vst [vmem:[%s218 + $0x78] sm:$0xff] %v991
        %1129 = vst [vmem:[%s218 + $0x80] sm:$0xff] %v995
        %1130 = vst [vmem:[%s218 + $0x88] sm:$0xff] %v997
        %1131 = vst [vmem:[%s218 + $0x90] sm:$0xff] %v999
        %1132 = vst [vmem:[%s218 + $0x98] sm:$0xff] %v1001
        %1133 = vst [vmem:[%s218 + $0xa0] sm:$0xff] %v1005
        %1134 = vst [vmem:[%s218 + $0xa8] sm:$0xff] %v1007
        %1135 = vst [vmem:[%s218 + $0xb0] sm:$0xff] %v1009
        %1136 = vst [vmem:[%s218 + $0xb8] sm:$0xff] %v1011
        %1137 = vst [vmem:[%s218 + $0xc0] sm:$0xff] %v1015
        %1138 = vst [vmem:[%s218 + $0xc8] sm:$0xff] %v1017
        %1139 = vst [vmem:[%s218 + $0xd0] sm:$0xff] %v1019
        %1140 = vst [vmem:[%s218 + $0xd8] sm:$0xff] %v1021
        %1141 = vst [vmem:[%s218 + $0xe0] sm:$0xff] %v1025
        %1142 = vst [vmem:[%s218 + $0xe8] sm:$0xff] %v1027
        %1143 = vst [vmem:[%s218 + $0xf0] sm:$0xff] %v1029
        %1144 = vst [vmem:[%s218 + $0xf8] sm:$0xff] %v1031
        %1145 = vst [vmem:[%s218 + $0x100] sm:$0xff] %v1035
        %1146 = vst [vmem:[%s218 + $0x108] sm:$0xff] %v1037
        %1147 = vst [vmem:[%s218 + $0x110] sm:$0xff] %v1039
        %1148 = vst [vmem:[%s218 + $0x118] sm:$0xff] %v1041
        %1149 = vst [vmem:[%s218 + $0x120] sm:$0xff] %v1045
        %1150 = vst [vmem:[%s218 + $0x128] sm:$0xff] %v1047
        %1151 = vst [vmem:[%s218 + $0x130] sm:$0xff] %v1049
        %1152 = vst [vmem:[%s218 + $0x138] sm:$0xff] %v1051
        %1153 = vst [vmem:[%s218 + $0x140] sm:$0xff] %v1055
        %1154 = vst [vmem:[%s218 + $0x148] sm:$0xff] %v1057
        %1155 = vst [vmem:[%s218 + $0x150] sm:$0xff] %v1059
        %1156 = vst [vmem:[%s218 + $0x158] sm:$0xff] %v1061
        %1157 = vst [vmem:[%s218 + $0x160] sm:$0xff] %v1065
        %1158 = vst [vmem:[%s218 + $0x168] sm:$0xff] %v1067
        %1159 = vst [vmem:[%s218 + $0x170] sm:$0xff] %v1069
        %1160 = vst [vmem:[%s218 + $0x178] sm:$0xff] %v1071
        %1161 = vst [vmem:[%s218 + $0x180] sm:$0xff] %v1075
        %1162 = vst [vmem:[%s218 + $0x188] sm:$0xff] %v1077
        %1163 = vst [vmem:[%s218 + $0x190] sm:$0xff] %v1079
        %1164 = vst [vmem:[%s218 + $0x198] sm:$0xff] %v1081
        %1165 = vst [vmem:[%s218 + $0x1a0] sm:$0xff] %v1085
        %1166 = vst [vmem:[%s218 + $0x1a8] sm:$0xff] %v1087
        %1167 = vst [vmem:[%s218 + $0x1b0] sm:$0xff] %v1089
        %1168 = vst [vmem:[%s218 + $0x1b8] sm:$0xff] %v1091
        %1169 = vst [vmem:[%s218 + $0x1c0] sm:$0xff] %v1095
        %1170 = vst [vmem:[%s218 + $0x1c8] sm:$0xff] %v1097
        %1171 = vst [vmem:[%s218 + $0x1d0] sm:$0xff] %v1099
        %1172 = vst [vmem:[%s218 + $0x1d8] sm:$0xff] %v1101
        %1173 = vst [vmem:[%s218 + $0x1e0] sm:$0xff] %v1105
        %1174 = vst [vmem:[%s218 + $0x1e8] sm:$0xff] %v1107
        %1175 = vst [vmem:[%s218 + $0x1f0] sm:$0xff] %v1109
        %1176 = vst [vmem:[%s218 + $0x1f8] sm:$0xff] %v1111
        %s1177 = sand.u32 %s137, 1
        %s1178 = scalar_lea.sflag [#allocation3], %s1177
        %s1179 = sand.u32 %s137, 1
        %s1180 = smul.addr %s1179, 512
        %s1181 = scalar_lea.vmem [#allocation2], %s1180
        // Predicated region
        $region41: #{decoder_forward.1} parent=39 // pred_check
          %p1182 = pneg %p147
        $region42: #{decoder_forward.1} parent=39 // pred_check_branch
          %1184 = sbr.rel (%p1182) target = $region44
        $region43: #{decoder_forward.1} parent=39 // pred_region
          %s1185 = smul.u32 32, %s19
          %s1187 = ssub.s32 8192, 8192
          %1188 = vsyncadd %s1178, %s1187
          %s1189 = smul.addr %s1185, 2
          %s1190 = smul.addr %s1189, 128
          %s1191 = scalar_lea.hbm %s5, %s1190
          %s1192 = sshll.u32 %s1181, 4
          %s1193 = int_to_ptr.vmem [resolvable:$true] %s1192
          %1198 = dma.vmem_to_hbm [thread:$0]  %s1193, 8192, %s1191, %s1178, 256, 256, 16
        $region44: #{decoder_forward.1} parent=39 // pred_fallthru
          _
      $region40: #{decoder_forward.1} parent=5 // pred_fallthru
        _
      %p1199 = scmp.le.s32.totalorder 2, %s14
      // Predicated region
      $region45: #{decoder_forward.1} parent=5 // pred_check
        %p1200 = pneg %p1199
      $region46: #{decoder_forward.1} parent=5 // pred_check_branch
        %1202 = sbr.rel (%p1200) target = $region48
      $region47: #{decoder_forward.1} parent=5 // pred_region
        %s1203 = ssub.s32 %s14, 2
        // Predicated region
        $region49: #{decoder_forward.1} parent=47 // pred_check
          %p1204 = pneg %p153
        $region50: #{decoder_forward.1} parent=47 // pred_check_branch
          %1206 = sbr.rel (%p1204) target = $region52
        $region51: #{decoder_forward.1} parent=47 // pred_region
          %s1207 = sand.u32 %s138, 1
          %s1208 = scalar_lea.sflag [#allocation3], %s1207
          %s1209 = sand.u32 %s138, 1
          %s1210 = smul.addr %s1209, 512
          %s1211 = scalar_lea.vmem [#allocation2], %s1210
          %1212 = dma.done %s1208, 8192
        $region52: #{decoder_forward.1} parent=47 // pred_fallthru
          _
      $region48: #{decoder_forward.1} parent=5 // pred_fallthru
        _
    $region6: #{decoder_forward.1} parent=1 // loop_footer
      %s18 = sadd.s32 1, %s14
    $region7: #{decoder_forward.1} parent=1 // loop_footer_branch
      %13 = sbr.rel target = $region3
    $region8: #{decoder_forward.1} parent=1 // loop_exit
      _
    %1213 = vsyncpa [#allocation3], 1
    %s1214 = scalar_lea.sflag [#allocation3], 1
    %1215 = vsyncpa %s1214, 1

</llo_original>
